<compile_context>
chip_gen: v5e
topology: v5e:2x2
jax: 0.10.0
libtpu: 0.0.40
codegen_flags: <defaults>
</compile_context>

<pallas_src>
import jax
import jax.numpy as jnp
from jax import lax
from jax.experimental import pallas as pl
from jax.experimental.pallas import tpu as pltpu

_EPS = 1e-3
# pool window = conv taps (kh,kw) in {(1,1),(1,2),(2,1),(2,2)} -> t = kh*3+kw
_POOL_TAPS = (4, 5, 7, 8)


def _conv_pool_stats_kernel(p_ref, w_ref, b_ref, pre_ref, stats_ref):
    """Pass 1: fused conv(3x3,s2)+bias + maxpool(2x2,s2) + per-tile BN partials.

    p_ref    : (1, 9*Cin, TM)   im2col patches, channel-major (bf16)
    w_ref    : (Ccv, 9*Cin)     conv weight, rows = output channels (bf16)
    b_ref    : (Ccv, 1)         conv bias (f32)
    pre_ref  : (1, Cout, TM)    f32 pre-BN activations (conv rows, then pool rows)
    stats_ref: (1, 1, Cout, 2)  f32 per-tile [sum, sum_sq] per channel
    """
    ccv = w_ref.shape[0]
    cin = p_ref.shape[1] // 9

    p = p_ref[0]                                                  # (9*Cin, TM)

    # 3x3 stride-2 conv == a single MXU matmul over K = 9*Cin, plus bias.
    conv = jnp.dot(w_ref[...], p,
                   preferred_element_type=jnp.float32)            # (Ccv, TM)
    conv = conv + b_ref[...]                                      # lane-broadcast

    # 2x2 stride-2 max pool == max over 4 taps of the same patch block.
    t0, t1, t2, t3 = [p[t * cin:(t + 1) * cin, :] for t in _POOL_TAPS]
    pool = jnp.maximum(jnp.maximum(t0, t1), jnp.maximum(t2, t3))
    pool = pool.astype(jnp.float32)                               # (Cin, TM)

    # torch.cat([conv, pool], dim=1): static channel slices, no concatenate.
    pre_ref[0, 0:ccv, :] = conv
    pre_ref[0, ccv:, :] = pool

    # Per-channel partial sums / sums of squares over this tile (lane reduce).
    s_c = jnp.sum(conv, axis=1, keepdims=True)                    # (Ccv, 1)
    q_c = jnp.sum(conv * conv, axis=1, keepdims=True)
    s_p = jnp.sum(pool, axis=1, keepdims=True)                    # (Cin, 1)
    q_p = jnp.sum(pool * pool, axis=1, keepdims=True)
    stats_ref[0, 0, 0:ccv, :] = jnp.concatenate([s_c, q_c], axis=1)
    stats_ref[0, 0, ccv:, :] = jnp.concatenate([s_p, q_p], axis=1)


def _bn_relu_kernel(pre_ref, scale_ref, shift_ref, o_ref):
    """Pass 2: y = relu(pre * scale + shift), per-channel scale/shift."""
    o_ref[0] = jnp.maximum(pre_ref[0] * scale_ref[...] + shift_ref[...], 0.0)


def _pick_tile(hw, cap=2048):
    """Tile along the flattened Ho*Wo axis: a multiple of 128 that divides hw
    (lane-dense, no partial blocks), or hw itself when hw is small."""
    if hw <= cap:
        return hw
    best = None
    t = 128
    while t <= cap:
        if hw % t == 0:
            best = t
        t += 128
    if best is not None:
        return best
    # Fallback: smallest multiple-of-128 divisor above the cap; else full hw.
    t = cap + 128
    while t < hw:
        if hw % t == 0:
            return t
        t += 128
    return hw


def downsampler_block(x_nchw, w_oihw, b_conv, gamma, beta, *,
                      compute_dtype=jnp.bfloat16):
    """ERFNet DownsamplerBlock forward. Takes / returns NCHW like the module."""
    n, cin, h, w = x_nchw.shape
    assert h % 2 == 0 and w % 2 == 0, "even H, W expected"
    # TODO(synk): odd H/W (PyTorch MaxPool2d(2,2) floor-drops the last row/col).
    ccv = w_oihw.shape[0]
    cout = ccv + cin
    ho, wo = h // 2, w // 2
    hw = ho * wo
    tm = _pick_tile(hw)
    mt = hw // tm
    kk = 9 * cin

    # ---- im2col in channel-major layout (one gather pass, no NCHW->NHWC) ----
    xp = jnp.pad(x_nchw, ((0, 0), (0, 0), (1, 1), (1, 1)))
    taps = [xp[:, :, kh:kh + 2 * ho:2, kw:kw + 2 * wo:2]          # (N,Cin,Ho,Wo)
            for kh in range(3) for kw in range(3)]
    patches = jnp.stack(taps, axis=1).reshape(n, kk, hw).astype(compute_dtype)
    # weight: OIHW -> (Ccv, kh, kw, Cin) -> (Ccv, 9*Cin), matching patch rows.
    w_mat = jnp.transpose(w_oihw, (0, 2, 3, 1)).reshape(ccv, kk).astype(compute_dtype)
    b_col = b_conv.reshape(ccv, 1).astype(jnp.float32)

    parallel2 = pltpu.CompilerParams(
        dimension_semantics=("parallel", "parallel"))

    # ---- pass 1: conv + bias + pool + per-tile BN partial sums ----
    pass1_cost = pl.CostEstimate(
        flops=2 * n * hw * ccv * kk,
        transcendentals=0,
        bytes_accessed=(n * kk * hw * 2 + ccv * kk * 2
                        + n * cout * hw * 4 + n * mt * cout * 2 * 4))
    pre, stats = pl.pallas_call(
        _conv_pool_stats_kernel,
        grid=(n, mt),
        in_specs=[
            pl.BlockSpec((1, kk, tm), lambda i, j: (i, 0, j)),
            pl.BlockSpec((ccv, kk), lambda i, j: (0, 0)),
            pl.BlockSpec((ccv, 1), lambda i, j: (0, 0)),
        ],
        out_specs=[
            pl.BlockSpec((1, cout, tm), lambda i, j: (i, 0, j)),
            pl.BlockSpec((1, 1, cout, 2), lambda i, j: (i, j, 0, 0)),
        ],
        out_shape=[
            jax.ShapeDtypeStruct((n, cout, hw), jnp.float32),
            jax.ShapeDtypeStruct((n, mt, cout, 2), jnp.float32),
        ],
        compiler_params=parallel2,
        cost_estimate=pass1_cost,
    )(patches, w_mat, b_col)

    # ---- tiny per-channel reduction + BN affine folding (XLA, negligible) ----
    totals = jnp.sum(stats, axis=(0, 1))                          # (Cout, 2)
    count = jnp.float32(n * hw)
    mean = totals[:, 0] / count
    var = jnp.maximum(totals[:, 1] / count - mean * mean, 0.0)    # biased var
    scale = gamma * lax.rsqrt(var + _EPS)
    shift = beta - mean * scale

    # ---- pass 2: normalize + ReLU, output directly in NCHW layout ----
    pass2_cost = pl.CostEstimate(
        flops=2 * n * cout * hw,
        transcendentals=0,
        bytes_accessed=2 * n * cout * hw * 4 + 2 * cout * 4)
    out = pl.pallas_call(
        _bn_relu_kernel,
        grid=(n, mt),
        in_specs=[
            pl.BlockSpec((1, cout, tm), lambda i, j: (i, 0, j)),
            pl.BlockSpec((cout, 1), lambda i, j: (0, 0)),
            pl.BlockSpec((cout, 1), lambda i, j: (0, 0)),
        ],
        out_specs=pl.BlockSpec((1, cout, tm), lambda i, j: (i, 0, j)),
        out_shape=jax.ShapeDtypeStruct((n, cout, hw), jnp.float32),
        compiler_params=parallel2,
        cost_estimate=pass2_cost,
    )(pre,
      scale.reshape(cout, 1).astype(jnp.float32),
      shift.reshape(cout, 1).astype(jnp.float32))

    return out.reshape(n, cout, ho, wo)                           # metadata-only


def reference(x_nchw, w_oihw, bias, gamma, beta, compute_dtype=jnp.bfloat16):
    """Pure-JAX reference. Conv/pool inputs are rounded to the kernel's compute
    dtype (so the bf16 MXU path is compared like-for-like); BN math is f32."""
    x = x_nchw.astype(compute_dtype).astype(jnp.float32)
    w = w_oihw.astype(compute_dtype).astype(jnp.float32)
    conv = lax.conv_general_dilated(
        x, w, window_strides=(2, 2), padding=((1, 1), (1, 1)),
        dimension_numbers=("NCHW", "OIHW", "NCHW"))
    conv = conv + bias[None, :, None, None]
    pool = lax.reduce_window(x, -jnp.inf, lax.max,
                             (1, 1, 2, 2), (1, 1, 2, 2), "VALID")
    pre = jnp.concatenate([conv, pool], axis=1)
    mean = jnp.mean(pre, axis=(0, 2, 3), keepdims=True)
    var = jnp.mean((pre - mean) ** 2, axis=(0, 2, 3), keepdims=True)
    y = (pre - mean) * lax.rsqrt(var + _EPS) * gamma[None, :, None, None] \
        + beta[None, :, None, None]
    return jnp.maximum(y, 0.0)


if __name__ == "__main__":
    ninput, noutput = 4, 16
    n, h, w = 2, 16, 16

    key = jax.random.PRNGKey(0)
    k1, k2, k3, k4, k5 = jax.random.split(key, 5)
    x = jax.random.normal(k1, (n, ninput, h, w), jnp.float32)
    w_conv = 0.1 * jax.random.normal(k2, (noutput - ninput, ninput, 3, 3),
                                     jnp.float32)
    b_conv = 0.1 * jax.random.normal(k3, (noutput - ninput,), jnp.float32)
    gamma = 1.0 + 0.1 * jax.random.normal(k4, (noutput,), jnp.float32)
    beta = 0.1 * jax.random.normal(k5, (noutput,), jnp.float32)

    fwd = jax.jit(downsampler_block)
    out = fwd(x, w_conv, b_conv, gamma, beta)
    jax.block_until_ready(out)
    assert out.shape == (n, noutput, h // 2, w // 2), out.shape

    ref = reference(x, w_conv, b_conv, gamma, beta)
    err = float(jnp.max(jnp.abs(out - ref)))
    assert jnp.allclose(out, ref, atol=1e-3, rtol=1e-3), err
    print("KERNEL_OK")
</pallas_src>

<mosaic_0001>
module attributes {stable_mosaic.version = 11 : i64} {
  func.func @_conv_pool_stats_kernel(%arg0: i32, %arg1: i32, %arg2: memref<1x36x64xbf16, #tpu.memory_space<vmem>>, %arg3: memref<12x36xbf16, #tpu.memory_space<vmem>>, %arg4: memref<12x1xf32, #tpu.memory_space<vmem>>, %arg5: memref<1x16x64xf32, #tpu.memory_space<vmem>>, %arg6: memref<1x1x16x2xf32, #tpu.memory_space<vmem>>) attributes {dimension_semantics = [#tpu.dimension_semantics<parallel>, #tpu.dimension_semantics<parallel>], iteration_bounds = array<i64: 2, 1>, scalar_prefetch = 0 : i64, scratch_operands = 0 : i64, tpu.core_type = #tpu.core_type<tc>, window_params = [{transform_indices = @transform_0, window_bounds = array<i64: 1, 36, 64>}, {pipeline_mode = #tpu.pipeline_mode<synchronous>, transform_indices = @transform_1, window_bounds = array<i64: 12, 36>}, {pipeline_mode = #tpu.pipeline_mode<synchronous>, transform_indices = @transform_2, window_bounds = array<i64: 12, 1>}, {transform_indices = @transform_3, window_bounds = array<i64: 1, 16, 64>}, {transform_indices = @transform_4, window_bounds = array<i64: 1, 1, 16, 2>}]} {
    %c0 = arith.constant 0 : index
    %c0_0 = arith.constant 0 : index
    %c0_1 = arith.constant 0 : index
    %0 = vector.load %arg2[%c0, %c0_0, %c0_1] : memref<1x36x64xbf16, #tpu.memory_space<vmem>>, vector<1x36x64xbf16>
    %1 = vector.shape_cast %0 : vector<1x36x64xbf16> to vector<36x64xbf16>
    %c0_2 = arith.constant 0 : index
    %c0_3 = arith.constant 0 : index
    %2 = vector.load %arg3[%c0_2, %c0_3] : memref<12x36xbf16, #tpu.memory_space<vmem>>, vector<12x36xbf16>
    %cst = arith.constant dense<0.000000e+00> : vector<12x64xf32>
    %3 = tpu.matmul %2, %1, %cst {dimension_numbers = #tpu.dot_dimension_numbers<[1], [0], [0], [1], [0, 0, 1, 1], [], []>} : vector<12x36xbf16>, vector<36x64xbf16>, vector<12x64xf32> -> vector<12x64xf32>
    %c0_4 = arith.constant 0 : index
    %c0_5 = arith.constant 0 : index
    %4 = vector.load %arg4[%c0_4, %c0_5] : memref<12x1xf32, #tpu.memory_space<vmem>>, vector<12x1xf32>
    %5 = vector.broadcast %4 : vector<12x1xf32> to vector<12x64xf32>
    %6 = arith.addf %3, %5 : vector<12x64xf32>
    %7 = vector.extract_strided_slice %1 {offsets = [16, 0], sizes = [4, 64], strides = [1, 1]} : vector<36x64xbf16> to vector<4x64xbf16>
    %8 = vector.extract_strided_slice %1 {offsets = [20, 0], sizes = [4, 64], strides = [1, 1]} : vector<36x64xbf16> to vector<4x64xbf16>
    %9 = vector.extract_strided_slice %1 {offsets = [28, 0], sizes = [4, 64], strides = [1, 1]} : vector<36x64xbf16> to vector<4x64xbf16>
    %10 = vector.extract_strided_slice %1 {offsets = [32, 0], sizes = [4, 64], strides = [1, 1]} : vector<36x64xbf16> to vector<4x64xbf16>
    %11 = arith.maximumf %7, %8 : vector<4x64xbf16>
    %12 = arith.maximumf %9, %10 : vector<4x64xbf16>
    %13 = arith.maximumf %11, %12 : vector<4x64xbf16>
    %14 = arith.extf %13 : vector<4x64xbf16> to vector<4x64xf32>
    %c0_6 = arith.constant 0 : index
    %c0_7 = arith.constant 0 : index
    %c0_8 = arith.constant 0 : index
    %15 = vector.load %arg5[%c0_6, %c0_7, %c0_8] : memref<1x16x64xf32, #tpu.memory_space<vmem>>, vector<1x12x64xf32>
    %16 = vector.shape_cast %15 : vector<1x12x64xf32> to vector<12x64xf32>
    %17 = vector.shape_cast %6 : vector<12x64xf32> to vector<1x12x64xf32>
    tpu.vector_store %arg5[%c0_6, %c0_7, %c0_8], %17 {strides = array<i32>} : memref<1x16x64xf32, #tpu.memory_space<vmem>>, vector<1x12x64xf32>,
    %c0_9 = arith.constant 0 : index
    %c12 = arith.constant 12 : index
    %c0_10 = arith.constant 0 : index
    %18 = vector.load %arg5[%c0_9, %c12, %c0_10] : memref<1x16x64xf32, #tpu.memory_space<vmem>>, vector<1x4x64xf32>
    %19 = vector.shape_cast %18 : vector<1x4x64xf32> to vector<4x64xf32>
    %20 = vector.shape_cast %14 : vector<4x64xf32> to vector<1x4x64xf32>
    tpu.vector_store %arg5[%c0_9, %c12, %c0_10], %20 {strides = array<i32>} : memref<1x16x64xf32, #tpu.memory_space<vmem>>, vector<1x4x64xf32>,
    %cst_11 = arith.constant dense<0.000000e+00> : vector<12xf32>
    %21 = vector.multi_reduction <add>, %6, %cst_11 [1] : vector<12x64xf32> to vector<12xf32>
    %22 = vector.shape_cast %21 : vector<12xf32> to vector<12x1xf32>
    %23 = arith.mulf %6, %6 : vector<12x64xf32>
    %cst_12 = arith.constant dense<0.000000e+00> : vector<12xf32>
    %24 = vector.multi_reduction <add>, %23, %cst_12 [1] : vector<12x64xf32> to vector<12xf32>
    %25 = vector.shape_cast %24 : vector<12xf32> to vector<12x1xf32>
    %cst_13 = arith.constant dense<0.000000e+00> : vector<4xf32>
    %26 = vector.multi_reduction <add>, %14, %cst_13 [1] : vector<4x64xf32> to vector<4xf32>
    %27 = vector.shape_cast %26 : vector<4xf32> to vector<4x1xf32>
    %28 = arith.mulf %14, %14 : vector<4x64xf32>
    %cst_14 = arith.constant dense<0.000000e+00> : vector<4xf32>
    %29 = vector.multi_reduction <add>, %28, %cst_14 [1] : vector<4x64xf32> to vector<4xf32>
    %30 = vector.shape_cast %29 : vector<4xf32> to vector<4x1xf32>
    %31 = tpu.concatenate %22, %25 in 1 : vector<12x1xf32>, vector<12x1xf32> -> vector<12x2xf32>
    %c0_15 = arith.constant 0 : index
    %c0_16 = arith.constant 0 : index
    %c0_17 = arith.constant 0 : index
    %c0_18 = arith.constant 0 : index
    %32 = vector.load %arg6[%c0_15, %c0_16, %c0_17, %c0_18] : memref<1x1x16x2xf32, #tpu.memory_space<vmem>>, vector<1x1x12x2xf32>
    %33 = vector.shape_cast %32 : vector<1x1x12x2xf32> to vector<12x2xf32>
    %34 = vector.shape_cast %31 : vector<12x2xf32> to vector<1x1x12x2xf32>
    tpu.vector_store %arg6[%c0_15, %c0_16, %c0_17, %c0_18], %34 {strides = array<i32>} : memref<1x1x16x2xf32, #tpu.memory_space<vmem>>, vector<1x1x12x2xf32>,
    %35 = tpu.concatenate %27, %30 in 1 : vector<4x1xf32>, vector<4x1xf32> -> vector<4x2xf32>
    %c0_19 = arith.constant 0 : index
    %c0_20 = arith.constant 0 : index
    %c12_21 = arith.constant 12 : index
    %c0_22 = arith.constant 0 : index
    %36 = vector.load %arg6[%c0_19, %c0_20, %c12_21, %c0_22] : memref<1x1x16x2xf32, #tpu.memory_space<vmem>>, vector<1x1x4x2xf32>
    %37 = vector.shape_cast %36 : vector<1x1x4x2xf32> to vector<4x2xf32>
    %38 = vector.shape_cast %35 : vector<4x2xf32> to vector<1x1x4x2xf32>
    tpu.vector_store %arg6[%c0_19, %c0_20, %c12_21, %c0_22], %38 {strides = array<i32>} : memref<1x1x16x2xf32, #tpu.memory_space<vmem>>, vector<1x1x4x2xf32>,
    return
  }
  func.func @transform_0(%arg0: i32, %arg1: i32) -> (i32, i32, i32) {
    %c0_i32 = arith.constant 0 : i32
    %c0_i32_0 = arith.constant 0 : i32
    return %arg0, %c0_i32, %arg1 : i32, i32, i32
  }
  func.func @transform_1(%arg0: i32, %arg1: i32) -> (i32, i32) {
    %c0_i32 = arith.constant 0 : i32
    %c0_i32_0 = arith.constant 0 : i32
    %c0_i32_1 = arith.constant 0 : i32
    return %c0_i32, %c0_i32_0 : i32, i32
  }
  func.func @transform_2(%arg0: i32, %arg1: i32) -> (i32, i32) {
    %c0_i32 = arith.constant 0 : i32
    %c0_i32_0 = arith.constant 0 : i32
    %c0_i32_1 = arith.constant 0 : i32
    return %c0_i32, %c0_i32_0 : i32, i32
  }
  func.func @transform_3(%arg0: i32, %arg1: i32) -> (i32, i32, i32) {
    %c0_i32 = arith.constant 0 : i32
    %c0_i32_0 = arith.constant 0 : i32
    return %arg0, %c0_i32, %arg1 : i32, i32, i32
  }
  func.func @transform_4(%arg0: i32, %arg1: i32) -> (i32, i32, i32, i32) {
    %c0_i32 = arith.constant 0 : i32
    %c0_i32_0 = arith.constant 0 : i32
    %c0_i32_1 = arith.constant 0 : i32
    return %arg0, %arg1, %c0_i32, %c0_i32_0 : i32, i32, i32, i32
  }
}

module attributes {stable_mosaic.version = 11 : i64} {
  func.func @_bn_relu_kernel(%arg0: i32, %arg1: i32, %arg2: memref<1x16x64xf32, #tpu.memory_space<vmem>>, %arg3: memref<16x1xf32, #tpu.memory_space<vmem>>, %arg4: memref<16x1xf32, #tpu.memory_space<vmem>>, %arg5: memref<1x16x64xf32, #tpu.memory_space<vmem>>) attributes {dimension_semantics = [#tpu.dimension_semantics<parallel>, #tpu.dimension_semantics<parallel>], iteration_bounds = array<i64: 2, 1>, scalar_prefetch = 0 : i64, scratch_operands = 0 : i64, tpu.core_type = #tpu.core_type<tc>, window_params = [{transform_indices = @transform_0, window_bounds = array<i64: 1, 16, 64>}, {pipeline_mode = #tpu.pipeline_mode<synchronous>, transform_indices = @transform_1, window_bounds = array<i64: 16, 1>}, {pipeline_mode = #tpu.pipeline_mode<synchronous>, transform_indices = @transform_2, window_bounds = array<i64: 16, 1>}, {transform_indices = @transform_3, window_bounds = array<i64: 1, 16, 64>}]} {
    %c0 = arith.constant 0 : index
    %c0_0 = arith.constant 0 : index
    %c0_1 = arith.constant 0 : index
    %0 = vector.load %arg2[%c0, %c0_0, %c0_1] : memref<1x16x64xf32, #tpu.memory_space<vmem>>, vector<1x16x64xf32>
    %1 = vector.shape_cast %0 : vector<1x16x64xf32> to vector<16x64xf32>
    %c0_2 = arith.constant 0 : index
    %c0_3 = arith.constant 0 : index
    %2 = vector.load %arg3[%c0_2, %c0_3] : memref<16x1xf32, #tpu.memory_space<vmem>>, vector<16x1xf32>
    %3 = vector.broadcast %2 : vector<16x1xf32> to vector<16x64xf32>
    %4 = arith.mulf %1, %3 : vector<16x64xf32>
    %c0_4 = arith.constant 0 : index
    %c0_5 = arith.constant 0 : index
    %5 = vector.load %arg4[%c0_4, %c0_5] : memref<16x1xf32, #tpu.memory_space<vmem>>, vector<16x1xf32>
    %6 = vector.broadcast %5 : vector<16x1xf32> to vector<16x64xf32>
    %7 = arith.addf %4, %6 : vector<16x64xf32>
    %cst = arith.constant 0.000000e+00 : f32
    %8 = vector.broadcast %cst : f32 to vector<16x64xf32>
    %9 = arith.maximumf %7, %8 : vector<16x64xf32>
    %c0_6 = arith.constant 0 : index
    %c0_7 = arith.constant 0 : index
    %c0_8 = arith.constant 0 : index
    %10 = vector.load %arg5[%c0_6, %c0_7, %c0_8] : memref<1x16x64xf32, #tpu.memory_space<vmem>>, vector<1x16x64xf32>
    %11 = vector.shape_cast %10 : vector<1x16x64xf32> to vector<16x64xf32>
    %12 = vector.shape_cast %9 : vector<16x64xf32> to vector<1x16x64xf32>
    tpu.vector_store %arg5[%c0_6, %c0_7, %c0_8], %12 {strides = array<i32>} : memref<1x16x64xf32, #tpu.memory_space<vmem>>, vector<1x16x64xf32>,
    return
  }
  func.func @transform_0(%arg0: i32, %arg1: i32) -> (i32, i32, i32) {
    %c0_i32 = arith.constant 0 : i32
    %c0_i32_0 = arith.constant 0 : i32
    return %arg0, %c0_i32, %arg1 : i32, i32, i32
  }
  func.func @transform_1(%arg0: i32, %arg1: i32) -> (i32, i32) {
    %c0_i32 = arith.constant 0 : i32
    %c0_i32_0 = arith.constant 0 : i32
    %c0_i32_1 = arith.constant 0 : i32
    return %c0_i32, %c0_i32_0 : i32, i32
  }
  func.func @transform_2(%arg0: i32, %arg1: i32) -> (i32, i32) {
    %c0_i32 = arith.constant 0 : i32
    %c0_i32_0 = arith.constant 0 : i32
    %c0_i32_1 = arith.constant 0 : i32
    return %c0_i32, %c0_i32_0 : i32, i32
  }
  func.func @transform_3(%arg0: i32, %arg1: i32) -> (i32, i32, i32) {
    %c0_i32 = arith.constant 0 : i32
    %c0_i32_0 = arith.constant 0 : i32
    return %arg0, %c0_i32, %arg1 : i32, i32, i32
  }
}

</mosaic_0001>

<llo_original>
// kernel: downsampler_block.3
$region0: #{downsampler_block.3}
  #allocation0 [shape = 'u32[]', space=smem, size = 0x4, offset = 0x4, fixed_abs, tag = 'smem constant byte address 0x4 - core index']
  #allocation1 [shape = 'u32[72,128]{1,0:T(1,128)}', space=vmem, size = 0x9000, scoped, tag = 'internal scratch']
  %s0 = inlined_call_operand.vmem [shape: f32[2,16,64], index: 0, kind: input, shape index: {}]
  %s1 = inlined_call_operand.vmem [shape: f32[16,1], index: 1, kind: input, shape index: {}]
  %s2 = inlined_call_operand.vmem [shape: f32[16,1], index: 2, kind: input, shape index: {}]
  %s3 = inlined_call_operand.vmem [shape: f32[2,16,64], index: 3, kind: output, shape index: {}]
  %s4 = sld [smem:[#allocation0]]
  $region45: #{downsampler_block.3} parent=0
    _
  %s6 = ssub.s32 1, %s4
  %s7 = scalar_select 0, %s6, %s4
  loop: start=0, step=1, limit=4
  $region2: #{downsampler_block.3} parent=0 // loop_pre_header
    _
  $region3: #{downsampler_block.3} parent=0 // loop_header
    %s9 = sphi 0, %s13
    %p10 = scmp.ge.s32.totalorder %s9, 4
    %s16 = sphi 0, %s28
    %s17 = sphi 0, %s24
    %s18 = sphi 0, %s16
    %s19 = sphi 0, %s17
    %s20 = sphi 0, %s18
    %s21 = sphi 0, %s19
    %s33 = sphi 0, %s35
    %s36 = sphi 0, %s33
    %s37 = sphi 0, %s36
    %s53 = sphi 0, %s37
    %s57 = sphi 0, %s57
    %s59 = sphi 0, %s57
    %s60 = sphi 0, %s59
    %s74 = sphi 0, %s60
    %s78 = sphi 0, %s78
    %s80 = sphi 0, %s78
    %s81 = sphi 0, %s80
    %s95 = sphi 0, %s81
    %s103 = sphi 0, %s105
    %s106 = sphi 0, %s103
    %s107 = sphi 0, %s106
    %s123 = sphi 0, %s107
  $region4: #{downsampler_block.3} parent=0 // loop_header_branch
    %12 = sbr.rel (%p10) target = $region8
  $region5: #{downsampler_block.3} parent=0 // loop_body
    %s14 = ssub.s32 %s9, 1
    %s15 = ssub.s32 %s9, 2
    %s22 = sadd.s32 1, %s17
    %p23 = scmp.ge.s32.totalorder %s22, 1
    %s24 = scalar_select %p23, 0, %s22
    %s25 = sadd.s32 1, %s16
    %s26 = scalar_select %p23, %s25, %s16
    %p27 = scmp.ge.s32.totalorder %s26, 2
    %s28 = scalar_select %p27, 0, %s26
    %s29 = ssub.s32 %s16, %s28
    %s30 = ssub.s32 %s17, %s24
    %s31 = sor.u32 %s29, %s30
    %p32 = scmp.eq.s32.totalorder %s31, 0
    %s34 = sadd.s32 %s33, 1
    %s35 = scalar_select %p32, %s33, %s34
    %p38 = pneg %p32
    %p39 = scmp.eq.s32.totalorder %s9, 1
    %p40 = por %p38, %p39
    %p41 = scmp.ne.s32.totalorder %s33, %s36
    %p42 = scmp.eq.s32.totalorder %s9, 0
    %p43 = por %p41, %p42
    %p44 = scmp.ne.s32.totalorder %s33, %s36
    %p45 = scmp.eq.s32.totalorder %s14, 1
    %p46 = por %p44, %p45
    %p47 = scmp.ne.s32.totalorder %s36, %s37
    %p48 = scmp.eq.s32.totalorder %s14, 0
    %p49 = por %p47, %p48
    %p50 = scmp.ne.s32.totalorder %s36, %s37
    %p51 = scmp.eq.s32.totalorder %s15, 1
    %p52 = por %p50, %p51
    %p54 = scmp.ne.s32.totalorder %s37, %s53
    %p55 = scmp.eq.s32.totalorder %s15, 0
    %p56 = por %p54, %p55
    %s58 = sadd.s32 %s57, 1
    %p61 = scmp.eq.s32.totalorder %s9, 1
    %p62 = scmp.ne.s32.totalorder %s57, %s59
    %p63 = scmp.eq.s32.totalorder %s9, 0
    %p64 = por %p62, %p63
    %p65 = scmp.ne.s32.totalorder %s57, %s59
    %p66 = scmp.eq.s32.totalorder %s14, 1
    %p67 = por %p65, %p66
    %p68 = scmp.ne.s32.totalorder %s59, %s60
    %p69 = scmp.eq.s32.totalorder %s14, 0
    %p70 = por %p68, %p69
    %p71 = scmp.ne.s32.totalorder %s59, %s60
    %p72 = scmp.eq.s32.totalorder %s15, 1
    %p73 = por %p71, %p72
    %p75 = scmp.ne.s32.totalorder %s60, %s74
    %p76 = scmp.eq.s32.totalorder %s15, 0
    %p77 = por %p75, %p76
    %s79 = sadd.s32 %s78, 1
    %p82 = scmp.eq.s32.totalorder %s9, 1
    %p83 = scmp.ne.s32.totalorder %s78, %s80
    %p84 = scmp.eq.s32.totalorder %s9, 0
    %p85 = por %p83, %p84
    %p86 = scmp.ne.s32.totalorder %s78, %s80
    %p87 = scmp.eq.s32.totalorder %s14, 1
    %p88 = por %p86, %p87
    %p89 = scmp.ne.s32.totalorder %s80, %s81
    %p90 = scmp.eq.s32.totalorder %s14, 0
    %p91 = por %p89, %p90
    %p92 = scmp.ne.s32.totalorder %s80, %s81
    %p93 = scmp.eq.s32.totalorder %s15, 1
    %p94 = por %p92, %p93
    %p96 = scmp.ne.s32.totalorder %s81, %s95
    %p97 = scmp.eq.s32.totalorder %s15, 0
    %p98 = por %p96, %p97
    %s99 = ssub.s32 %s16, %s28
    %s100 = ssub.s32 %s17, %s24
    %s101 = sor.u32 %s99, %s100
    %p102 = scmp.eq.s32.totalorder %s101, 0
    %s104 = sadd.s32 %s103, 1
    %s105 = scalar_select %p102, %s103, %s104
    %p108 = pneg %p102
    %p109 = scmp.eq.s32.totalorder %s9, 1
    %p110 = por %p108, %p109
    %p111 = scmp.ne.s32.totalorder %s103, %s106
    %p112 = scmp.eq.s32.totalorder %s9, 0
    %p113 = por %p111, %p112
    %p114 = scmp.ne.s32.totalorder %s103, %s106
    %p115 = scmp.eq.s32.totalorder %s14, 1
    %p116 = por %p114, %p115
    %p117 = scmp.ne.s32.totalorder %s106, %s107
    %p118 = scmp.eq.s32.totalorder %s14, 0
    %p119 = por %p117, %p118
    %p120 = scmp.ne.s32.totalorder %s106, %s107
    %p121 = scmp.eq.s32.totalorder %s15, 1
    %p122 = por %p120, %p121
    %p124 = scmp.ne.s32.totalorder %s107, %s123
    %p125 = scmp.eq.s32.totalorder %s15, 0
    %p126 = por %p124, %p125
    %p127 = scmp.le.s32.totalorder 1, %s9
    %p128 = scmp.lt.s32.totalorder %s9, 3
    %p129 = pnand %p127, %p128
    %p130 = pneg %p129
    // Predicated region
    $region9: #{downsampler_block.3} parent=5 // pred_check
      _
    $region10: #{downsampler_block.3} parent=5 // pred_check_branch
      %132 = sbr.rel (%p129) target = $region12
    $region11: #{downsampler_block.3} parent=5 // pred_region
      %s133 = ssub.s32 %s9, 1
      // Predicated region
      $region13: #{downsampler_block.3} parent=11 // pred_check
        %p134 = pneg %p70
      $region14: #{downsampler_block.3} parent=11 // pred_check_branch
        %136 = sbr.rel (%p134) target = $region16
      $region15: #{downsampler_block.3} parent=11 // pred_region
        _
      $region16: #{downsampler_block.3} parent=11 // pred_fallthru
        _
      // Predicated region
      $region17: #{downsampler_block.3} parent=11 // pred_check
        %p137 = pneg %p91
      $region18: #{downsampler_block.3} parent=11 // pred_check_branch
        %139 = sbr.rel (%p137) target = $region20
      $region19: #{downsampler_block.3} parent=11 // pred_region
        _
      $region20: #{downsampler_block.3} parent=11 // pred_fallthru
        _
    $region12: #{downsampler_block.3} parent=5 // pred_fallthru
      _
    %p140 = scmp.lt.s32.totalorder %s9, 2
    // Predicated region
    $region21: #{downsampler_block.3} parent=5 // pred_check
      %p141 = pneg %p140
    $region22: #{downsampler_block.3} parent=5 // pred_check_branch
      %143 = sbr.rel (%p141) target = $region24
    $region23: #{downsampler_block.3} parent=5 // pred_region
      // Predicated region
      $region25: #{downsampler_block.3} parent=23 // pred_check
        %p144 = pneg %p43
      $region26: #{downsampler_block.3} parent=23 // pred_check_branch
        %146 = sbr.rel (%p144) target = $region28
      $region27: #{downsampler_block.3} parent=23 // pred_region
        %p147 = scmp.lt.s32.totalorder %s16, 1
        %s148 = scalar_select %p147, %s16, 1
        %p149 = scmp.lt.s32.totalorder %s17, 0
        %s150 = scalar_select %p149, %s17, 0
        %s151 = smul.addr %s148, 2
        %s152 = sadd.s32 %s150, %s151
        %s153 = smul.addr %s152, 8
        %s154 = scalar_lea.vmem %s0, %s153
      $region28: #{downsampler_block.3} parent=23 // pred_fallthru
        _
    $region24: #{downsampler_block.3} parent=5 // pred_fallthru
      _
    %p155 = scmp.le.s32.totalorder 1, %s9
    %p156 = scmp.lt.s32.totalorder %s9, 3
    %p157 = pnand %p155, %p156
    %p158 = pneg %p157
    // Predicated region
    $region29: #{downsampler_block.3} parent=5 // pred_check
      _
    $region30: #{downsampler_block.3} parent=5 // pred_check_branch
      %160 = sbr.rel (%p157) target = $region32
    $region31: #{downsampler_block.3} parent=5 // pred_region
      %s161 = ssub.s32 %s9, 1
      %p162 = scmp.lt.s32.totalorder %s18, 1
      %s163 = scalar_select %p162, %s18, 1
      %p164 = scmp.lt.s32.totalorder %s19, 0
      %s165 = scalar_select %p164, %s19, 0
      %s166 = smul.addr %s163, 2
      %s167 = sadd.s32 %s165, %s166
      %s168 = smul.addr %s167, 8
      %s169 = scalar_lea.vmem %s0, %s168
      %p170 = pneg %p49
      %p171 = pneg %p46
      %p172 = pneg %p70
      %p173 = pneg %p67
      %p174 = pneg %p91
      %p175 = pneg %p88
      %p176 = pneg %p119
      %p177 = pneg %p116
      %p178 = scmp.lt.s32.totalorder %s18, 1
      %s179 = scalar_select %p178, %s18, 1
      %p180 = scmp.lt.s32.totalorder %s19, 0
      %s181 = scalar_select %p180, %s19, 0
      %s182 = smul.addr %s179, 2
      %s183 = sadd.s32 %s181, %s182
      %s184 = smul.addr %s183, 8
      %s185 = scalar_lea.vmem %s3, %s184
      %p186 = scmp.lt.s32.totalorder %s18, 1
      %s187 = scalar_select %p186, %s18, 1
      %p188 = scmp.lt.s32.totalorder %s19, 0
      %s189 = scalar_select %p188, %s19, 0
      %s190 = smul.addr %s187, 2
      %s191 = sadd.s32 %s189, %s190
      %s192 = smul.addr %s191, 8
      %s193 = scalar_lea.vmem %s0, %s192
      %p194 = scmp.lt.s32.totalorder %s18, 1
      %s195 = scalar_select %p194, %s18, 1
      %p196 = scmp.lt.s32.totalorder %s19, 0
      %s197 = scalar_select %p196, %s19, 0
      %s198 = smul.addr %s195, 2
      %s199 = sadd.s32 %s197, %s198
      %s200 = smul.addr %s199, 8
      %s201 = scalar_lea.vmem %s3, %s200
      %v202 = vld [vmem:[%s193] sm:$0xff]
      %v203 = vld [vmem:[%s193 + $0x8] sm:$0xff]
      %v204 = vld [vmem:[%s1] sm:$0xff]
      %v205 = vld [vmem:[%s1 + $0x8] sm:$0xff]
      %207 = vset.pattern.permute.xlu0 0
      %208 = vperm.xlu0 %207, %v204
      %v209 = vpop.permute.xlu0 %208
      %212 = vset.pattern.permute.xlu0 0
      %213 = vperm.xlu0 %212, %v205
      %v214 = vpop.permute.xlu0 %213
      %v216 = vmul.f32 %v202, %v209
      %v217 = vmul.f32 %v203, %v214
      %v218 = vld [vmem:[%s2] sm:$0xff]
      %v219 = vld [vmem:[%s2 + $0x8] sm:$0xff]
      %221 = vset.pattern.permute.xlu0 0
      %222 = vperm.xlu0 %221, %v218
      %v223 = vpop.permute.xlu0 %222
      %226 = vset.pattern.permute.xlu0 0
      %227 = vperm.xlu0 %226, %v219
      %v228 = vpop.permute.xlu0 %227
      %v230 = vadd.f32 %v216, %v223
      %v231 = vadd.f32 %v217, %v228
      %v232 = vmax.f32 %v230, 0.0
      %v233 = vmax.f32 %v231, 0.0
      %vm234 = vcmask 523264
      %235 = vst.msk [vmem:[%s201] sm:$0xff] %vm234, %v232
      %236 = vst.msk [vmem:[%s201 + $0x8] sm:$0xff] %vm234, %v233
      %p237 = scmp.lt.s32.totalorder %s18, 1
      %s238 = scalar_select %p237, %s18, 1
      %p239 = scmp.lt.s32.totalorder %s19, 0
      %s240 = scalar_select %p239, %s19, 0
      %s241 = smul.addr %s238, 2
      %s242 = sadd.s32 %s240, %s241
      %s243 = smul.addr %s242, 8
      %s244 = scalar_lea.vmem %s3, %s243
      // Predicated region
      $region33: #{downsampler_block.3} parent=31 // pred_check
        %p245 = pneg %p116
      $region34: #{downsampler_block.3} parent=31 // pred_check_branch
        %247 = sbr.rel (%p245) target = $region36
      $region35: #{downsampler_block.3} parent=31 // pred_region
        _
      $region36: #{downsampler_block.3} parent=31 // pred_fallthru
        _
    $region32: #{downsampler_block.3} parent=5 // pred_fallthru
      _
    %p248 = scmp.le.s32.totalorder 2, %s9
    // Predicated region
    $region37: #{downsampler_block.3} parent=5 // pred_check
      %p249 = pneg %p248
    $region38: #{downsampler_block.3} parent=5 // pred_check_branch
      %251 = sbr.rel (%p249) target = $region40
    $region39: #{downsampler_block.3} parent=5 // pred_region
      %s252 = ssub.s32 %s9, 2
      // Predicated region
      $region41: #{downsampler_block.3} parent=39 // pred_check
        %p253 = pneg %p122
      $region42: #{downsampler_block.3} parent=39 // pred_check_branch
        %255 = sbr.rel (%p253) target = $region44
      $region43: #{downsampler_block.3} parent=39 // pred_region
        %p256 = scmp.lt.s32.totalorder %s20, 1
        %s257 = scalar_select %p256, %s20, 1
        %p258 = scmp.lt.s32.totalorder %s21, 0
        %s259 = scalar_select %p258, %s21, 0
        %s260 = smul.addr %s257, 2
        %s261 = sadd.s32 %s259, %s260
        %s262 = smul.addr %s261, 8
        %s263 = scalar_lea.vmem %s3, %s262
      $region44: #{downsampler_block.3} parent=39 // pred_fallthru
        _
    $region40: #{downsampler_block.3} parent=5 // pred_fallthru
      _
  $region6: #{downsampler_block.3} parent=0 // loop_footer
    %s13 = sadd.s32 1, %s9
  $region7: #{downsampler_block.3} parent=0 // loop_footer_branch
    %8 = sbr.rel target = $region3
  $region8: #{downsampler_block.3} parent=0 // loop_exit
    _

// kernel: downsampler_block.2
$region0: #{downsampler_block.2}
  #allocation0 [shape = 'u32[]', space=smem, size = 0x4, offset = 0x4, fixed_abs, tag = 'smem constant byte address 0x4 - core index']
  #allocation1 [shape = 'u32[72,128]{1,0:T(1,128)}', space=vmem, size = 0x9000, scoped, tag = 'internal scratch']
  %s0 = inlined_call_operand.vmem [shape: bf16[2,36,64], index: 0, kind: input, shape index: {}]
  %s1 = inlined_call_operand.vmem [shape: bf16[12,36], index: 1, kind: input, shape index: {}]
  %s2 = inlined_call_operand.vmem [shape: f32[12,1], index: 2, kind: input, shape index: {}]
  %s3 = inlined_call_operand.vmem [shape: f32[2,16,64], index: 3, kind: output, shape index: {0}]
  %s4 = inlined_call_operand.vmem [shape: f32[2,1,16,2], index: 4, kind: output, shape index: {1}]
  %5 = xla_tuple %s3, %s4
  %s6 = sld [smem:[#allocation0]]
  $region53: #{downsampler_block.2} parent=0
    _
  %s8 = ssub.s32 1, %s6
  %s9 = scalar_select 0, %s8, %s6
  loop: start=0, step=1, limit=4
  $region2: #{downsampler_block.2} parent=0 // loop_pre_header
    _
  $region3: #{downsampler_block.2} parent=0 // loop_header
    %s11 = sphi 0, %s15
    %p12 = scmp.ge.s32.totalorder %s11, 4
    %s18 = sphi 0, %s30
    %s19 = sphi 0, %s26
    %s20 = sphi 0, %s18
    %s21 = sphi 0, %s19
    %s22 = sphi 0, %s20
    %s23 = sphi 0, %s21
    %s35 = sphi 0, %s37
    %s38 = sphi 0, %s35
    %s39 = sphi 0, %s38
    %s55 = sphi 0, %s39
    %s59 = sphi 0, %s59
    %s61 = sphi 0, %s59
    %s62 = sphi 0, %s61
    %s76 = sphi 0, %s62
    %s80 = sphi 0, %s80
    %s82 = sphi 0, %s80
    %s83 = sphi 0, %s82
    %s97 = sphi 0, %s83
    %s105 = sphi 0, %s107
    %s108 = sphi 0, %s105
    %s109 = sphi 0, %s108
    %s125 = sphi 0, %s109
    %s133 = sphi 0, %s135
    %s136 = sphi 0, %s133
    %s137 = sphi 0, %s136
    %s153 = sphi 0, %s137
  $region4: #{downsampler_block.2} parent=0 // loop_header_branch
    %14 = sbr.rel (%p12) target = $region8
  $region5: #{downsampler_block.2} parent=0 // loop_body
    %s16 = ssub.s32 %s11, 1
    %s17 = ssub.s32 %s11, 2
    %s24 = sadd.s32 1, %s19
    %p25 = scmp.ge.s32.totalorder %s24, 1
    %s26 = scalar_select %p25, 0, %s24
    %s27 = sadd.s32 1, %s18
    %s28 = scalar_select %p25, %s27, %s18
    %p29 = scmp.ge.s32.totalorder %s28, 2
    %s30 = scalar_select %p29, 0, %s28
    %s31 = ssub.s32 %s18, %s30
    %s32 = ssub.s32 %s19, %s26
    %s33 = sor.u32 %s31, %s32
    %p34 = scmp.eq.s32.totalorder %s33, 0
    %s36 = sadd.s32 %s35, 1
    %s37 = scalar_select %p34, %s35, %s36
    %p40 = pneg %p34
    %p41 = scmp.eq.s32.totalorder %s11, 1
    %p42 = por %p40, %p41
    %p43 = scmp.ne.s32.totalorder %s35, %s38
    %p44 = scmp.eq.s32.totalorder %s11, 0
    %p45 = por %p43, %p44
    %p46 = scmp.ne.s32.totalorder %s35, %s38
    %p47 = scmp.eq.s32.totalorder %s16, 1
    %p48 = por %p46, %p47
    %p49 = scmp.ne.s32.totalorder %s38, %s39
    %p50 = scmp.eq.s32.totalorder %s16, 0
    %p51 = por %p49, %p50
    %p52 = scmp.ne.s32.totalorder %s38, %s39
    %p53 = scmp.eq.s32.totalorder %s17, 1
    %p54 = por %p52, %p53
    %p56 = scmp.ne.s32.totalorder %s39, %s55
    %p57 = scmp.eq.s32.totalorder %s17, 0
    %p58 = por %p56, %p57
    %s60 = sadd.s32 %s59, 1
    %p63 = scmp.eq.s32.totalorder %s11, 1
    %p64 = scmp.ne.s32.totalorder %s59, %s61
    %p65 = scmp.eq.s32.totalorder %s11, 0
    %p66 = por %p64, %p65
    %p67 = scmp.ne.s32.totalorder %s59, %s61
    %p68 = scmp.eq.s32.totalorder %s16, 1
    %p69 = por %p67, %p68
    %p70 = scmp.ne.s32.totalorder %s61, %s62
    %p71 = scmp.eq.s32.totalorder %s16, 0
    %p72 = por %p70, %p71
    %p73 = scmp.ne.s32.totalorder %s61, %s62
    %p74 = scmp.eq.s32.totalorder %s17, 1
    %p75 = por %p73, %p74
    %p77 = scmp.ne.s32.totalorder %s62, %s76
    %p78 = scmp.eq.s32.totalorder %s17, 0
    %p79 = por %p77, %p78
    %s81 = sadd.s32 %s80, 1
    %p84 = scmp.eq.s32.totalorder %s11, 1
    %p85 = scmp.ne.s32.totalorder %s80, %s82
    %p86 = scmp.eq.s32.totalorder %s11, 0
    %p87 = por %p85, %p86
    %p88 = scmp.ne.s32.totalorder %s80, %s82
    %p89 = scmp.eq.s32.totalorder %s16, 1
    %p90 = por %p88, %p89
    %p91 = scmp.ne.s32.totalorder %s82, %s83
    %p92 = scmp.eq.s32.totalorder %s16, 0
    %p93 = por %p91, %p92
    %p94 = scmp.ne.s32.totalorder %s82, %s83
    %p95 = scmp.eq.s32.totalorder %s17, 1
    %p96 = por %p94, %p95
    %p98 = scmp.ne.s32.totalorder %s83, %s97
    %p99 = scmp.eq.s32.totalorder %s17, 0
    %p100 = por %p98, %p99
    %s101 = ssub.s32 %s18, %s30
    %s102 = ssub.s32 %s19, %s26
    %s103 = sor.u32 %s101, %s102
    %p104 = scmp.eq.s32.totalorder %s103, 0
    %s106 = sadd.s32 %s105, 1
    %s107 = scalar_select %p104, %s105, %s106
    %p110 = pneg %p104
    %p111 = scmp.eq.s32.totalorder %s11, 1
    %p112 = por %p110, %p111
    %p113 = scmp.ne.s32.totalorder %s105, %s108
    %p114 = scmp.eq.s32.totalorder %s11, 0
    %p115 = por %p113, %p114
    %p116 = scmp.ne.s32.totalorder %s105, %s108
    %p117 = scmp.eq.s32.totalorder %s16, 1
    %p118 = por %p116, %p117
    %p119 = scmp.ne.s32.totalorder %s108, %s109
    %p120 = scmp.eq.s32.totalorder %s16, 0
    %p121 = por %p119, %p120
    %p122 = scmp.ne.s32.totalorder %s108, %s109
    %p123 = scmp.eq.s32.totalorder %s17, 1
    %p124 = por %p122, %p123
    %p126 = scmp.ne.s32.totalorder %s109, %s125
    %p127 = scmp.eq.s32.totalorder %s17, 0
    %p128 = por %p126, %p127
    %s129 = ssub.s32 %s18, %s30
    %s130 = ssub.s32 %s19, %s26
    %s131 = sor.u32 %s129, %s130
    %p132 = scmp.eq.s32.totalorder %s131, 0
    %s134 = sadd.s32 %s133, 1
    %s135 = scalar_select %p132, %s133, %s134
    %p138 = pneg %p132
    %p139 = scmp.eq.s32.totalorder %s11, 1
    %p140 = por %p138, %p139
    %p141 = scmp.ne.s32.totalorder %s133, %s136
    %p142 = scmp.eq.s32.totalorder %s11, 0
    %p143 = por %p141, %p142
    %p144 = scmp.ne.s32.totalorder %s133, %s136
    %p145 = scmp.eq.s32.totalorder %s16, 1
    %p146 = por %p144, %p145
    %p147 = scmp.ne.s32.totalorder %s136, %s137
    %p148 = scmp.eq.s32.totalorder %s16, 0
    %p149 = por %p147, %p148
    %p150 = scmp.ne.s32.totalorder %s136, %s137
    %p151 = scmp.eq.s32.totalorder %s17, 1
    %p152 = por %p150, %p151
    %p154 = scmp.ne.s32.totalorder %s137, %s153
    %p155 = scmp.eq.s32.totalorder %s17, 0
    %p156 = por %p154, %p155
    %p157 = scmp.le.s32.totalorder 1, %s11
    %p158 = scmp.lt.s32.totalorder %s11, 3
    %p159 = pnand %p157, %p158
    %p160 = pneg %p159
    // Predicated region
    $region9: #{downsampler_block.2} parent=5 // pred_check
      _
    $region10: #{downsampler_block.2} parent=5 // pred_check_branch
      %162 = sbr.rel (%p159) target = $region12
    $region11: #{downsampler_block.2} parent=5 // pred_region
      %s163 = ssub.s32 %s11, 1
      // Predicated region
      $region13: #{downsampler_block.2} parent=11 // pred_check
        %p164 = pneg %p72
      $region14: #{downsampler_block.2} parent=11 // pred_check_branch
        %166 = sbr.rel (%p164) target = $region16
      $region15: #{downsampler_block.2} parent=11 // pred_region
        _
      $region16: #{downsampler_block.2} parent=11 // pred_fallthru
        _
      // Predicated region
      $region17: #{downsampler_block.2} parent=11 // pred_check
        %p167 = pneg %p93
      $region18: #{downsampler_block.2} parent=11 // pred_check_branch
        %169 = sbr.rel (%p167) target = $region20
      $region19: #{downsampler_block.2} parent=11 // pred_region
        _
      $region20: #{downsampler_block.2} parent=11 // pred_fallthru
        _
    $region12: #{downsampler_block.2} parent=5 // pred_fallthru
      _
    %p170 = scmp.lt.s32.totalorder %s11, 2
    // Predicated region
    $region21: #{downsampler_block.2} parent=5 // pred_check
      %p171 = pneg %p170
    $region22: #{downsampler_block.2} parent=5 // pred_check_branch
      %173 = sbr.rel (%p171) target = $region24
    $region23: #{downsampler_block.2} parent=5 // pred_region
      // Predicated region
      $region25: #{downsampler_block.2} parent=23 // pred_check
        %p174 = pneg %p45
      $region26: #{downsampler_block.2} parent=23 // pred_check_branch
        %176 = sbr.rel (%p174) target = $region28
      $region27: #{downsampler_block.2} parent=23 // pred_region
        %p177 = scmp.lt.s32.totalorder %s18, 1
        %s178 = scalar_select %p177, %s18, 1
        %p179 = scmp.lt.s32.totalorder %s19, 0
        %s180 = scalar_select %p179, %s19, 0
        %s181 = smul.addr %s178, 5
        %s182 = sadd.s32 %s180, %s181
        %s183 = smul.addr %s182, 4
        %s184 = scalar_lea.vmem %s0, %s183
      $region28: #{downsampler_block.2} parent=23 // pred_fallthru
        _
    $region24: #{downsampler_block.2} parent=5 // pred_fallthru
      _
    %p185 = scmp.le.s32.totalorder 1, %s11
    %p186 = scmp.lt.s32.totalorder %s11, 3
    %p187 = pnand %p185, %p186
    %p188 = pneg %p187
    // Predicated region
    $region29: #{downsampler_block.2} parent=5 // pred_check
      _
    $region30: #{downsampler_block.2} parent=5 // pred_check_branch
      %190 = sbr.rel (%p187) target = $region32
    $region31: #{downsampler_block.2} parent=5 // pred_region
      %s191 = ssub.s32 %s11, 1
      %p192 = scmp.lt.s32.totalorder %s20, 1
      %s193 = scalar_select %p192, %s20, 1
      %p194 = scmp.lt.s32.totalorder %s21, 0
      %s195 = scalar_select %p194, %s21, 0
      %s196 = smul.addr %s193, 5
      %s197 = sadd.s32 %s195, %s196
      %s198 = smul.addr %s197, 4
      %s199 = scalar_lea.vmem %s0, %s198
      %p200 = pneg %p51
      %p201 = pneg %p48
      %p202 = pneg %p72
      %p203 = pneg %p69
      %p204 = pneg %p93
      %p205 = pneg %p90
      %p206 = pneg %p121
      %p207 = pneg %p118
      %p208 = scmp.lt.s32.totalorder %s20, 1
      %s209 = scalar_select %p208, %s20, 1
      %p210 = scmp.lt.s32.totalorder %s21, 0
      %s211 = scalar_select %p210, %s21, 0
      %s212 = smul.addr %s209, 2
      %s213 = sadd.s32 %s211, %s212
      %s214 = smul.addr %s213, 8
      %s215 = scalar_lea.vmem %s3, %s214
      %p216 = pneg %p149
      %p217 = pneg %p146
      %p218 = scmp.lt.s32.totalorder %s20, 1
      %s219 = scalar_select %p218, %s20, 1
      %p220 = scmp.lt.s32.totalorder %s21, 0
      %s221 = scalar_select %p220, %s21, 0
      %s222 = smul.addr %s221, 2
      %s223 = smul.addr %s219, 2
      %s224 = sadd.s32 %s222, %s223
      %s225 = smul.addr %s224, 8
      %s226 = scalar_lea.vmem %s4, %s225
      %p227 = scmp.lt.s32.totalorder %s20, 1
      %s228 = scalar_select %p227, %s20, 1
      %p229 = scmp.lt.s32.totalorder %s21, 0
      %s230 = scalar_select %p229, %s21, 0
      %s231 = smul.addr %s228, 5
      %s232 = sadd.s32 %s230, %s231
      %s233 = smul.addr %s232, 4
      %s234 = scalar_lea.vmem %s0, %s233
      %p235 = scmp.lt.s32.totalorder %s20, 1
      %s236 = scalar_select %p235, %s20, 1
      %p237 = scmp.lt.s32.totalorder %s21, 0
      %s238 = scalar_select %p237, %s21, 0
      %s239 = smul.addr %s236, 2
      %s240 = sadd.s32 %s238, %s239
      %s241 = smul.addr %s240, 8
      %s242 = scalar_lea.vmem %s3, %s241
      %p243 = scmp.lt.s32.totalorder %s20, 1
      %s244 = scalar_select %p243, %s20, 1
      %p245 = scmp.lt.s32.totalorder %s21, 0
      %s246 = scalar_select %p245, %s21, 0
      %s247 = smul.addr %s246, 2
      %s248 = smul.addr %s244, 2
      %s249 = sadd.s32 %s247, %s248
      %s250 = smul.addr %s249, 8
      %s251 = scalar_lea.vmem %s4, %s250
      %v253 = vld [vmem:[%s234] sm:$0xf]
      %v254 = vld [vmem:[%s234 + $0x4] sm:$0xf]
      %v255 = vld [vmem:[%s234 + $0x8] sm:$0xf]
      %v256 = vld [vmem:[%s234 + $0xc] sm:$0xf]
      %v257 = vld [vmem:[%s234 + $0x10] sm:$0x3]
      %v258 = vld [vmem:[%s1] sm:$0xf]
      %v259 = vld [vmem:[%s1 + $0x4] sm:$0x3]
      %v260 = vld [vmem:[%s2] sm:$0xff]
      %v261 = vld [vmem:[%s2 + $0x8] sm:$0xf]
      %263 = vset.pattern.permute.xlu0 0
      %264 = vperm.xlu0 %263, %v260
      %v265 = vpop.permute.xlu0 %264
      %268 = vset.pattern.permute.xlu0 0
      %269 = vperm.xlu0 %268, %v261
      %v270 = vpop.permute.xlu0 %269
      %v274 = vunpack.c.l.b16 %v258
      %v275 = vunpack.c.l.b16 %v259
      %v276 = vpack.c.b16 %v275, %v274
      %v282 = vunpack.c.l.b16 %v253
      %v283 = vunpack.c.l.b16 %v254
      %v284 = vunpack.c.l.b16 %v255
      %v285 = vunpack.c.l.b16 %v256
      %v286 = vunpack.c.l.b16 %v257
      %v287 = vpack.c.b16 %v283, %v282
      %v288 = vpack.c.b16 %v285, %v284
      %v289 = vpack.c.b16 %v286, %v286
      %vm292 = vcmask 293888
      %v294 = vsel %vm292, %v276, 0
      %vm296 = vcmask 1041408
      %v298 = vsel %vm296, %v289, 0
      %300 = vmatpush.bf16.msra.mxu0 0
      %301 = vmatpush.bf16.msra.mxu0 0
      %302 = vmatpush.bf16.msra.mxu0 0
      %303 = vmatpush.bf16.msra.mxu0 0
      %304 = vmatpush.bf16.msra.mxu0 0
      %305 = vmatpush.bf16.msra.mxu0 %v298
      %306 = vmatpush.bf16.msra.mxu0 %v288
      %307 = vmatpush.bf16.msra.mxu0 %v287
      %308 = vmatmul.bf16.gmra.mxu0 %v294
      %v309 = vpop.f32.mrf.mxu0
      %v310 = vadd.f32 %v265, %v309
      %v311 = vpop.f32.mrf.mxu0
      %v312 = vadd.f32 %v270, %v311
      %313 = vdwg.mxu0
      %v314 = vunpack.c.l.bf16 %v255
      %v316 = vrot.slane %v314, 4
      %v318 = vmax.f32 %v314, %v316
      %v319 = vpack.c.bf16 %v318, %v318
      %v320 = vunpack.c.l.bf16 %v256
      %v321 = vunpack.c.l.bf16 %v257
      %v323 = vrot.slane %v321, 4
      %v325 = vmax.f32 %v320, %v323
      %v326 = vpack.c.bf16 %v325, %v325
      %v327 = vunpack.c.l.bf16 %v319
      %v328 = vunpack.c.l.bf16 %v326
      %v330 = vrot.slane %v328, 4
      %v332 = vmax.f32 %v327, %v330
      %v333 = vpack.c.bf16 %v332, %v332
      %v334 = vunpack.c.l.bf16 %v333
      %vm335 = vcmask 523264
      %336 = vst.msk [vmem:[%s242] sm:$0xff] %vm335, %v310
      %vm337 = vcmask 519168
      %338 = vst.msk [vmem:[%s242 + $0x8] sm:$0xf] %vm337, %v312
      %339 = vst.msk [vmem:[%s242 + $0xc] sm:$0xf] %vm337, %v334
      %v340 = vsel %vm335, %v310, 0.0
      %341 = vadd.xlane.f32.xlu0 %v340
      %v342 = vpop.xlane.xlu0 %341
      %v343 = vsel %vm337, %v312, 0.0
      %344 = vadd.xlane.f32.xlu0 %v343
      %v345 = vpop.xlane.xlu0 %344
      %v346 = vmul.f32 %v310, %v310
      %v347 = vmul.f32 %v312, %v312
      %v348 = vsel %vm335, %v346, 0.0
      %349 = vadd.xlane.f32.xlu0 %v348
      %v350 = vpop.xlane.xlu0 %349
      %v351 = vsel %vm337, %v347, 0.0
      %352 = vadd.xlane.f32.xlu0 %v351
      %v353 = vpop.xlane.xlu0 %352
      %v354 = vsel %vm337, %v334, 0.0
      %355 = vadd.xlane.f32.xlu0 %v354
      %v356 = vpop.xlane.xlu0 %355
      %v357 = vmul.f32 %v334, %v334
      %v358 = vsel %vm337, %v357, 0.0
      %359 = vadd.xlane.f32.xlu0 %v358
      %v360 = vpop.xlane.xlu0 %359
      %vm361 = vcmask 7168
      %v362 = vsel %vm361, %v342, %v350
      %v363 = vsel %vm361, %v345, %v353
      %vm364 = vcmask 15360
      %365 = vst.msk [vmem:[%s251] sm:$0xff] %vm364, %v362
      %vm366 = vcmask 11264
      %367 = vst.msk [vmem:[%s251 + $0x8] sm:$0xf] %vm366, %v363
      %v368 = vsel %vm361, %v356, %v360
      %369 = vst.msk [vmem:[%s251 + $0xc] sm:$0xf] %vm366, %v368
      %p370 = scmp.lt.s32.totalorder %s20, 1
      %s371 = scalar_select %p370, %s20, 1
      %p372 = scmp.lt.s32.totalorder %s21, 0
      %s373 = scalar_select %p372, %s21, 0
      %s374 = smul.addr %s371, 2
      %s375 = sadd.s32 %s373, %s374
      %s376 = smul.addr %s375, 8
      %s377 = scalar_lea.vmem %s3, %s376
      %p378 = scmp.lt.s32.totalorder %s20, 1
      %s379 = scalar_select %p378, %s20, 1
      %p380 = scmp.lt.s32.totalorder %s21, 0
      %s381 = scalar_select %p380, %s21, 0
      %s382 = smul.addr %s381, 2
      %s383 = smul.addr %s379, 2
      %s384 = sadd.s32 %s382, %s383
      %s385 = smul.addr %s384, 8
      %s386 = scalar_lea.vmem %s4, %s385
      // Predicated region
      $region33: #{downsampler_block.2} parent=31 // pred_check
        %p387 = pneg %p118
      $region34: #{downsampler_block.2} parent=31 // pred_check_branch
        %389 = sbr.rel (%p387) target = $region36
      $region35: #{downsampler_block.2} parent=31 // pred_region
        _
      $region36: #{downsampler_block.2} parent=31 // pred_fallthru
        _
      // Predicated region
      $region37: #{downsampler_block.2} parent=31 // pred_check
        %p390 = pneg %p146
      $region38: #{downsampler_block.2} parent=31 // pred_check_branch
        %392 = sbr.rel (%p390) target = $region40
      $region39: #{downsampler_block.2} parent=31 // pred_region
        _
      $region40: #{downsampler_block.2} parent=31 // pred_fallthru
        _
    $region32: #{downsampler_block.2} parent=5 // pred_fallthru
      _
    %p393 = scmp.le.s32.totalorder 2, %s11
    // Predicated region
    $region41: #{downsampler_block.2} parent=5 // pred_check
      %p394 = pneg %p393
    $region42: #{downsampler_block.2} parent=5 // pred_check_branch
      %396 = sbr.rel (%p394) target = $region44
    $region43: #{downsampler_block.2} parent=5 // pred_region
      %s397 = ssub.s32 %s11, 2
      // Predicated region
      $region45: #{downsampler_block.2} parent=43 // pred_check
        %p398 = pneg %p124
      $region46: #{downsampler_block.2} parent=43 // pred_check_branch
        %400 = sbr.rel (%p398) target = $region48
      $region47: #{downsampler_block.2} parent=43 // pred_region
        %p401 = scmp.lt.s32.totalorder %s22, 1
        %s402 = scalar_select %p401, %s22, 1
        %p403 = scmp.lt.s32.totalorder %s23, 0
        %s404 = scalar_select %p403, %s23, 0
        %s405 = smul.addr %s402, 2
        %s406 = sadd.s32 %s404, %s405
        %s407 = smul.addr %s406, 8
        %s408 = scalar_lea.vmem %s3, %s407
      $region48: #{downsampler_block.2} parent=43 // pred_fallthru
        _
      // Predicated region
      $region49: #{downsampler_block.2} parent=43 // pred_check
        %p409 = pneg %p152
      $region50: #{downsampler_block.2} parent=43 // pred_check_branch
        %411 = sbr.rel (%p409) target = $region52
      $region51: #{downsampler_block.2} parent=43 // pred_region
        %p412 = scmp.lt.s32.totalorder %s22, 1
        %s413 = scalar_select %p412, %s22, 1
        %p414 = scmp.lt.s32.totalorder %s23, 0
        %s415 = scalar_select %p414, %s23, 0
        %s416 = smul.addr %s415, 2
        %s417 = smul.addr %s413, 2
        %s418 = sadd.s32 %s416, %s417
        %s419 = smul.addr %s418, 8
        %s420 = scalar_lea.vmem %s4, %s419
      $region52: #{downsampler_block.2} parent=43 // pred_fallthru
        _
    $region44: #{downsampler_block.2} parent=5 // pred_fallthru
      _
  $region6: #{downsampler_block.2} parent=0 // loop_footer
    %s15 = sadd.s32 1, %s11
  $region7: #{downsampler_block.2} parent=0 // loop_footer_branch
    %10 = sbr.rel target = $region3
  $region8: #{downsampler_block.2} parent=0 // loop_exit
    _

</llo_original>
